<compile_context>
chip_gen: v5e
topology: v5e:2x2
jax: 0.10.0
libtpu: 0.0.40
codegen_flags: <defaults>
</compile_context>

<pallas_src>
import functools
import math

import jax
import jax.numpy as jnp
from jax.experimental import pallas as pl
from jax.experimental.pallas import tpu as pltpu


_LANE = 128
_VMEM_BUDGET_BYTES = 16 * 1024 * 1024     # working-set target (safe on all gens)
_VMEM_LIMIT_BYTES = 32 * 1024 * 1024      # scoped VMEM limit passed to Mosaic


def _round_up(a: int, b: int) -> int:
    return ((a + b - 1) // b) * b


def _cdiv(a: int, b: int) -> int:
    return (a + b - 1) // b


# ---------------------------------------------------------------------------
# Kernels
# ---------------------------------------------------------------------------

def _proj_head_kernel_fused_k(x_ref, w_ref, b_ref, o_ref):
    """Full K in one block: single MXU pass + f32 bias epilogue, no accumulator."""
    acc = jnp.dot(x_ref[...], w_ref[...], preferred_element_type=jnp.float32)
    o_ref[...] = (acc + b_ref[...]).astype(o_ref.dtype)


def _proj_head_kernel_acc_k(x_ref, w_ref, b_ref, o_ref, acc_ref):
    """K split over the last grid axis: f32 VMEM accumulator, epilogue on last step."""
    k = pl.program_id(2)

    @pl.when(k == 0)
    def _():
        acc_ref[...] = jnp.zeros_like(acc_ref)

    acc_ref[...] += jnp.dot(x_ref[...], w_ref[...],
                            preferred_element_type=jnp.float32)

    @pl.when(k == pl.num_programs(2) - 1)
    def _():
        o_ref[...] = (acc_ref[...] + b_ref[...]).astype(o_ref.dtype)


# ---------------------------------------------------------------------------
# Tile selection
# ---------------------------------------------------------------------------

def _vmem_working_set_bytes(tm, tn, tk, with_acc):
    in_bytes = 2 * (tm * tk + tk * tn) * 2      # double-buffered bf16 input tiles
    out_bytes = 2 * tm * tn * 4                 # double-buffered f32 output tile
    bias_bytes = 2 * tn * 4
    acc_bytes = tm * tn * 4 if with_acc else 0
    return in_bytes + out_bytes + bias_bytes + acc_bytes


def _select_tiles(M, d_out, d_in):
    # N tile: lane-dense 128/256-wide when possible.
    if d_out <= _LANE:
        tn = d_out
    elif d_out % 256 == 0:
        tn = 256
    else:
        tn = _LANE
    grid_n = _cdiv(d_out, tn)

    # M tile: 128-multiples for large M; ensure >= 2 parallel blocks when
    # possible so both v7x TensorCores get work.
    if M <= _LANE:
        tm = M
    else:
        tm = min(512, _round_up(M, _LANE))
        if grid_n == 1 and _cdiv(M, tm) < 2:
            half = _round_up(_cdiv(M, 2), _LANE)
            if half < tm:
                tm = half
    grid_m = _cdiv(M, tm)

    # K tile: collapse to one block when the working set fits the budget,
    # otherwise split into the fewest 128-multiple chunks that do.
    k_aligned = _round_up(d_in, _LANE)
    nk = 1
    while True:
        tk = _round_up(_cdiv(k_aligned, nk), _LANE)
        fits = _vmem_working_set_bytes(tm, tn, tk, with_acc=(nk > 1)) <= _VMEM_BUDGET_BYTES
        if fits or tk == _LANE:
            break
        nk += 1
    nk = _cdiv(k_aligned, tk)          # drop any fully-padded trailing K block
    Kp = nk * tk
    return tm, tn, tk, grid_m, grid_n, nk, Kp


# ---------------------------------------------------------------------------
# Forward
# ---------------------------------------------------------------------------

def prepare_proj_head_params(weight, bias):
    """One-time parameter prep.

    weight: (d_out, d_in) -- PyTorch nn.Linear convention.
    Returns (w_t, b2d): w_t is (d_in, d_out) bf16 (lane-dense MXU RHS),
    b2d is (1, d_out) float32.
    """
    w_t = jnp.asarray(weight).T.astype(jnp.bfloat16)
    b2d = jnp.asarray(bias, jnp.float32).reshape(1, -1)
    return w_t, b2d


@functools.partial(jax.jit, static_argnames=("d_in",))
def proj_head_forward(x, w_t, b2d, *, d_in):
    """Equivalent of Proj_Head.forward: x.view(-1, d_in) @ W.T + b -> (M, d_out) f32."""
    d_out = w_t.shape[1]
    x2d = x.reshape(-1, d_in).astype(jnp.bfloat16)     # cast once, outside kernel
    M = x2d.shape[0]

    tm, tn, tk, grid_m, grid_n, nk, Kp = _select_tiles(M, d_out, d_in)

    # Only the reduction axis needs explicit zero padding for correctness;
    # XLA fuses it with the bf16 cast above, so x is rewritten at most once.
    if Kp != d_in:
        x2d = jnp.pad(x2d, ((0, 0), (0, Kp - d_in)))
        w_t = jnp.pad(w_t, ((0, Kp - d_in), (0, 0)))

    cost = pl.CostEstimate(
        flops=2 * M * Kp * d_out,
        transcendentals=0,
        bytes_accessed=2 * (M * Kp + Kp * d_out) + 4 * (M * d_out + d_out),
    )
    out_shape = jax.ShapeDtypeStruct((M, d_out), jnp.float32)

    if nk == 1:
        grid_spec = pltpu.PrefetchScalarGridSpec(
            num_scalar_prefetch=0,
            grid=(grid_m, grid_n),
            in_specs=[
                pl.BlockSpec((tm, Kp), lambda i, j: (i, 0)),     # x  (M, K)
                pl.BlockSpec((Kp, tn), lambda i, j: (0, j)),     # w  (K, N)
                pl.BlockSpec((1, tn), lambda i, j: (0, j)),      # bias (1, N)
            ],
            out_specs=pl.BlockSpec((tm, tn), lambda i, j: (i, j)),
        )
        kernel = _proj_head_kernel_fused_k
        semantics = ("parallel", "parallel")
    else:
        grid_spec = pltpu.PrefetchScalarGridSpec(
            num_scalar_prefetch=0,
            grid=(grid_m, grid_n, nk),
            in_specs=[
                pl.BlockSpec((tm, tk), lambda i, j, k: (i, k)),  # x  (M, K)
                pl.BlockSpec((tk, tn), lambda i, j, k: (k, j)),  # w  (K, N)
                pl.BlockSpec((1, tn), lambda i, j, k: (0, j)),   # bias (1, N)
            ],
            out_specs=pl.BlockSpec((tm, tn), lambda i, j, k: (i, j)),
            scratch_shapes=[pltpu.VMEM((tm, tn), jnp.float32)],
        )
        kernel = _proj_head_kernel_acc_k
        semantics = ("parallel", "parallel", "arbitrary")

    return pl.pallas_call(
        kernel,
        out_shape=out_shape,
        grid_spec=grid_spec,
        compiler_params=pltpu.CompilerParams(
            dimension_semantics=semantics,
            vmem_limit_bytes=_VMEM_LIMIT_BYTES,
        ),
        cost_estimate=cost,
    )(x2d, w_t, b2d)


def init_proj_head_params(key, d_in, d_out):
    # PyTorch nn.Linear default init: U(-1/sqrt(d_in), 1/sqrt(d_in)).
    k_w, k_b = jax.random.split(key)
    bound = 1.0 / math.sqrt(d_in)
    weight = jax.random.uniform(k_w, (d_out, d_in), jnp.float32, -bound, bound)
    bias = jax.random.uniform(k_b, (d_out,), jnp.float32, -bound, bound)
    return weight, bias


if __name__ == "__main__":
    key = jax.random.PRNGKey(0)
    k_x, k_p = jax.random.split(key)

    # Small shapes consistent with the module: d_in = C*H*W of a feature map.
    batch, C, H, W = 2, 4, 16, 16
    d_in = C * H * W          # 1024
    d_out = 128

    x = jax.random.normal(k_x, (batch, C, H, W), jnp.float32)
    weight, bias = init_proj_head_params(k_p, d_in, d_out)

    w_t, b2d = prepare_proj_head_params(weight, bias)     # one-time param prep
    y = proj_head_forward(x, w_t, b2d, d_in=d_in)
    y = jax.block_until_ready(y)

    # Reference (same math as the PyTorch forward) in f32.  Tolerance loosened
    # because the kernel uses bf16 MXU inputs with f32 accumulation.
    y_ref = x.reshape(-1, d_in) @ weight.T + bias
    assert y.shape == (batch, d_out), y.shape
    max_err = float(jnp.max(jnp.abs(y - y_ref)))
    assert jnp.allclose(y, y_ref, atol=3e-2, rtol=3e-2), max_err

    print("KERNEL_OK")
</pallas_src>

<mosaic_0001>
module attributes {stable_mosaic.version = 11 : i64} {
  func.func @_proj_head_kernel_fused_k(%arg0: i32, %arg1: i32, %arg2: memref<2x1024xbf16, #tpu.memory_space<vmem>>, %arg3: memref<1024x128xbf16, #tpu.memory_space<vmem>>, %arg4: memref<1x128xf32, #tpu.memory_space<vmem>>, %arg5: memref<2x128xf32, #tpu.memory_space<vmem>>) attributes {dimension_semantics = [#tpu.dimension_semantics<parallel>, #tpu.dimension_semantics<parallel>], iteration_bounds = array<i64: 1, 1>, scalar_prefetch = 0 : i64, scratch_operands = 0 : i64, tpu.core_type = #tpu.core_type<tc>, window_params = [{transform_indices = @transform_0, window_bounds = array<i64: 2, 1024>}, {transform_indices = @transform_1, window_bounds = array<i64: 1024, 128>}, {transform_indices = @transform_2, window_bounds = array<i64: 1, 128>}, {transform_indices = @transform_3, window_bounds = array<i64: 2, 128>}]} {
    %c0 = arith.constant 0 : index
    %c0_0 = arith.constant 0 : index
    %0 = vector.load %arg2[%c0, %c0_0] : memref<2x1024xbf16, #tpu.memory_space<vmem>>, vector<2x1024xbf16>
    %c0_1 = arith.constant 0 : index
    %c0_2 = arith.constant 0 : index
    %1 = vector.load %arg3[%c0_1, %c0_2] : memref<1024x128xbf16, #tpu.memory_space<vmem>>, vector<1024x128xbf16>
    %cst = arith.constant dense<0.000000e+00> : vector<2x128xf32>
    %2 = tpu.matmul %0, %1, %cst {dimension_numbers = #tpu.dot_dimension_numbers<[1], [0], [0], [1], [0, 0, 1, 1], [], []>} : vector<2x1024xbf16>, vector<1024x128xbf16>, vector<2x128xf32> -> vector<2x128xf32>
    %c0_3 = arith.constant 0 : index
    %c0_4 = arith.constant 0 : index
    %3 = vector.load %arg4[%c0_3, %c0_4] : memref<1x128xf32, #tpu.memory_space<vmem>>, vector<1x128xf32>
    %4 = vector.broadcast %3 : vector<1x128xf32> to vector<2x128xf32>
    %5 = arith.addf %2, %4 : vector<2x128xf32>
    %c0_5 = arith.constant 0 : index
    %c0_6 = arith.constant 0 : index
    %6 = vector.load %arg5[%c0_5, %c0_6] : memref<2x128xf32, #tpu.memory_space<vmem>>, vector<2x128xf32>
    tpu.vector_store %arg5[%c0_5, %c0_6], %5 {strides = array<i32>} : memref<2x128xf32, #tpu.memory_space<vmem>>, vector<2x128xf32>,
    return
  }
  func.func @transform_0(%arg0: i32, %arg1: i32) -> (i32, i32) {
    %c0_i32 = arith.constant 0 : i32
    %c0_i32_0 = arith.constant 0 : i32
    return %arg0, %c0_i32 : i32, i32
  }
  func.func @transform_1(%arg0: i32, %arg1: i32) -> (i32, i32) {
    %c0_i32 = arith.constant 0 : i32
    %c0_i32_0 = arith.constant 0 : i32
    return %c0_i32, %arg1 : i32, i32
  }
  func.func @transform_2(%arg0: i32, %arg1: i32) -> (i32, i32) {
    %c0_i32 = arith.constant 0 : i32
    %c0_i32_0 = arith.constant 0 : i32
    return %c0_i32, %arg1 : i32, i32
  }
  func.func @transform_3(%arg0: i32, %arg1: i32) -> (i32, i32) {
    %c0_i32 = arith.constant 0 : i32
    return %arg0, %arg1 : i32, i32
  }
}

</mosaic_0001>

<llo_original>
// kernel: proj_head_forward.1
$region0: #{proj_head_forward.1}
  #allocation0 [shape = 'u32[]', space=smem, size = 0x4, offset = 0x4, fixed_abs, tag = 'smem constant byte address 0x4 - core index']
  #allocation1 [shape = 'u32[72,128]{1,0:T(1,128)}', space=vmem, size = 0x9000, scoped, tag = 'internal scratch']
  %s0 = inlined_call_operand.vmem [shape: bf16[2,1024], index: 0, kind: input, shape index: {}]
  %s1 = inlined_call_operand.hbm [shape: bf16[1024,128], index: 1, kind: input, shape index: {}]
  %s2 = inlined_call_operand.vmem [shape: f32[1,128], index: 2, kind: input, shape index: {}]
  %s3 = inlined_call_operand.hbm [shape: f32[2,128], index: 3, kind: output, shape index: {}]
  %s4 = sld [smem:[#allocation0]]
  $region26: #{proj_head_forward.1} parent=0
    _
  %s6 = ssub.s32 1, %s4
  %s7 = scalar_select 0, %s6, %s4
  $region1: #{proj_head_forward.1} parent=0
    #allocation2 [shape = 'u8[262144]{0}', space=vmem, size = 0x40000, scoped, tag = 'input window, operand 1, single buffered']
    #allocation3 [shape = 's32[1]{0}', space=sflag, size = 0x4, scoped, tag = 'scoped memory for proj_head_forward.1']
    #allocation4 [shape = 's32[1]{0}', space=sflag, size = 0x4, scoped, tag = 'scoped memory for proj_head_forward.1']
    #allocation5 [shape = 'u8[1024]{0}', space=vmem, size = 0x400, scoped, tag = 'output window, operand 0, single buffered']
    %8 = vsyncpa [#allocation3], 0
    %9 = vsyncpa [#allocation4], 0
    // Predicated region
    $region2: #{proj_head_forward.1} parent=1 // pred_check
      _
    $region3: #{proj_head_forward.1} parent=1 // pred_check_branch
      %11 = sbr.rel (0) target = $region5
    $region4: #{proj_head_forward.1} parent=1 // pred_region
      _
    $region5: #{proj_head_forward.1} parent=1 // pred_fallthru
      _
    // Predicated region
    $region6: #{proj_head_forward.1} parent=1 // pred_check
      _
    $region7: #{proj_head_forward.1} parent=1 // pred_check_branch
      %13 = sbr.rel (0) target = $region9
    $region8: #{proj_head_forward.1} parent=1 // pred_region
      %15 = vsyncadd [#allocation3], 0
      %s16 = sshll.u32 %s1, 4
      %s17 = int_to_ptr.hbm [resolvable:$true] %s16
      %s18 = sshll.u32 [#allocation2], 4
      %s19 = int_to_ptr.vmem [resolvable:$true] %s18
      %24 = dma.hbm_to_vmem [thread:$0]  %s17, 8192, %s19, [#allocation3], 64, 64, 4
    $region9: #{proj_head_forward.1} parent=1 // pred_fallthru
      _
    // Predicated region
    $region10: #{proj_head_forward.1} parent=1 // pred_check
      _
    $region11: #{proj_head_forward.1} parent=1 // pred_check_branch
      %26 = sbr.rel (0) target = $region13
    $region12: #{proj_head_forward.1} parent=1 // pred_region
      _
    $region13: #{proj_head_forward.1} parent=1 // pred_fallthru
      _
    // Predicated region
    $region14: #{proj_head_forward.1} parent=1 // pred_check
      _
    $region15: #{proj_head_forward.1} parent=1 // pred_check_branch
      %28 = sbr.rel (0) target = $region17
    $region16: #{proj_head_forward.1} parent=1 // pred_region
      %30 = dma.done [#allocation3], 8192
    $region17: #{proj_head_forward.1} parent=1 // pred_fallthru
      _
    %v31 = vld [vmem:[%s0] sm:$0xff]
    %v32 = vld [vmem:[#allocation2] sm:$0xf]
    %v33 = vld [vmem:[#allocation2 + $0x4] sm:$0xf]
    %v34 = vld [vmem:[#allocation2 + $0x8] sm:$0xf]
    %v35 = vld [vmem:[#allocation2 + $0xc] sm:$0xf]
    %v36 = vld [vmem:[#allocation2 + $0x10] sm:$0xf]
    %v37 = vld [vmem:[#allocation2 + $0x14] sm:$0xf]
    %v38 = vld [vmem:[#allocation2 + $0x18] sm:$0xf]
    %v39 = vld [vmem:[#allocation2 + $0x1c] sm:$0xf]
    %v40 = vld [vmem:[#allocation2 + $0x20] sm:$0xf]
    %v41 = vld [vmem:[#allocation2 + $0x24] sm:$0xf]
    %v42 = vld [vmem:[#allocation2 + $0x28] sm:$0xf]
    %v43 = vld [vmem:[#allocation2 + $0x2c] sm:$0xf]
    %v44 = vld [vmem:[#allocation2 + $0x30] sm:$0xf]
    %v45 = vld [vmem:[#allocation2 + $0x34] sm:$0xf]
    %v46 = vld [vmem:[#allocation2 + $0x38] sm:$0xf]
    %v47 = vld [vmem:[#allocation2 + $0x3c] sm:$0xf]
    %v48 = vld [vmem:[#allocation2 + $0x40] sm:$0xf]
    %v49 = vld [vmem:[#allocation2 + $0x44] sm:$0xf]
    %v50 = vld [vmem:[#allocation2 + $0x48] sm:$0xf]
    %v51 = vld [vmem:[#allocation2 + $0x4c] sm:$0xf]
    %v52 = vld [vmem:[#allocation2 + $0x50] sm:$0xf]
    %v53 = vld [vmem:[#allocation2 + $0x54] sm:$0xf]
    %v54 = vld [vmem:[#allocation2 + $0x58] sm:$0xf]
    %v55 = vld [vmem:[#allocation2 + $0x5c] sm:$0xf]
    %v56 = vld [vmem:[#allocation2 + $0x60] sm:$0xf]
    %v57 = vld [vmem:[#allocation2 + $0x64] sm:$0xf]
    %v58 = vld [vmem:[#allocation2 + $0x68] sm:$0xf]
    %v59 = vld [vmem:[#allocation2 + $0x6c] sm:$0xf]
    %v60 = vld [vmem:[#allocation2 + $0x70] sm:$0xf]
    %v61 = vld [vmem:[#allocation2 + $0x74] sm:$0xf]
    %v62 = vld [vmem:[#allocation2 + $0x78] sm:$0xf]
    %v63 = vld [vmem:[#allocation2 + $0x7c] sm:$0xf]
    %v64 = vld [vmem:[#allocation2 + $0x80] sm:$0xf]
    %v65 = vld [vmem:[#allocation2 + $0x84] sm:$0xf]
    %v66 = vld [vmem:[#allocation2 + $0x88] sm:$0xf]
    %v67 = vld [vmem:[#allocation2 + $0x8c] sm:$0xf]
    %v68 = vld [vmem:[#allocation2 + $0x90] sm:$0xf]
    %v69 = vld [vmem:[#allocation2 + $0x94] sm:$0xf]
    %v70 = vld [vmem:[#allocation2 + $0x98] sm:$0xf]
    %v71 = vld [vmem:[#allocation2 + $0x9c] sm:$0xf]
    %v72 = vld [vmem:[#allocation2 + $0xa0] sm:$0xf]
    %v73 = vld [vmem:[#allocation2 + $0xa4] sm:$0xf]
    %v74 = vld [vmem:[#allocation2 + $0xa8] sm:$0xf]
    %v75 = vld [vmem:[#allocation2 + $0xac] sm:$0xf]
    %v76 = vld [vmem:[#allocation2 + $0xb0] sm:$0xf]
    %v77 = vld [vmem:[#allocation2 + $0xb4] sm:$0xf]
    %v78 = vld [vmem:[#allocation2 + $0xb8] sm:$0xf]
    %v79 = vld [vmem:[#allocation2 + $0xbc] sm:$0xf]
    %v80 = vld [vmem:[#allocation2 + $0xc0] sm:$0xf]
    %v81 = vld [vmem:[#allocation2 + $0xc4] sm:$0xf]
    %v82 = vld [vmem:[#allocation2 + $0xc8] sm:$0xf]
    %v83 = vld [vmem:[#allocation2 + $0xcc] sm:$0xf]
    %v84 = vld [vmem:[#allocation2 + $0xd0] sm:$0xf]
    %v85 = vld [vmem:[#allocation2 + $0xd4] sm:$0xf]
    %v86 = vld [vmem:[#allocation2 + $0xd8] sm:$0xf]
    %v87 = vld [vmem:[#allocation2 + $0xdc] sm:$0xf]
    %v88 = vld [vmem:[#allocation2 + $0xe0] sm:$0xf]
    %v89 = vld [vmem:[#allocation2 + $0xe4] sm:$0xf]
    %v90 = vld [vmem:[#allocation2 + $0xe8] sm:$0xf]
    %v91 = vld [vmem:[#allocation2 + $0xec] sm:$0xf]
    %v92 = vld [vmem:[#allocation2 + $0xf0] sm:$0xf]
    %v93 = vld [vmem:[#allocation2 + $0xf4] sm:$0xf]
    %v94 = vld [vmem:[#allocation2 + $0xf8] sm:$0xf]
    %v95 = vld [vmem:[#allocation2 + $0xfc] sm:$0xf]
    %v96 = vld [vmem:[#allocation2 + $0x100] sm:$0xf]
    %v97 = vld [vmem:[#allocation2 + $0x104] sm:$0xf]
    %v98 = vld [vmem:[#allocation2 + $0x108] sm:$0xf]
    %v99 = vld [vmem:[#allocation2 + $0x10c] sm:$0xf]
    %v100 = vld [vmem:[#allocation2 + $0x110] sm:$0xf]
    %v101 = vld [vmem:[#allocation2 + $0x114] sm:$0xf]
    %v102 = vld [vmem:[#allocation2 + $0x118] sm:$0xf]
    %v103 = vld [vmem:[#allocation2 + $0x11c] sm:$0xf]
    %v104 = vld [vmem:[#allocation2 + $0x120] sm:$0xf]
    %v105 = vld [vmem:[#allocation2 + $0x124] sm:$0xf]
    %v106 = vld [vmem:[#allocation2 + $0x128] sm:$0xf]
    %v107 = vld [vmem:[#allocation2 + $0x12c] sm:$0xf]
    %v108 = vld [vmem:[#allocation2 + $0x130] sm:$0xf]
    %v109 = vld [vmem:[#allocation2 + $0x134] sm:$0xf]
    %v110 = vld [vmem:[#allocation2 + $0x138] sm:$0xf]
    %v111 = vld [vmem:[#allocation2 + $0x13c] sm:$0xf]
    %v112 = vld [vmem:[#allocation2 + $0x140] sm:$0xf]
    %v113 = vld [vmem:[#allocation2 + $0x144] sm:$0xf]
    %v114 = vld [vmem:[#allocation2 + $0x148] sm:$0xf]
    %v115 = vld [vmem:[#allocation2 + $0x14c] sm:$0xf]
    %v116 = vld [vmem:[#allocation2 + $0x150] sm:$0xf]
    %v117 = vld [vmem:[#allocation2 + $0x154] sm:$0xf]
    %v118 = vld [vmem:[#allocation2 + $0x158] sm:$0xf]
    %v119 = vld [vmem:[#allocation2 + $0x15c] sm:$0xf]
    %v120 = vld [vmem:[#allocation2 + $0x160] sm:$0xf]
    %v121 = vld [vmem:[#allocation2 + $0x164] sm:$0xf]
    %v122 = vld [vmem:[#allocation2 + $0x168] sm:$0xf]
    %v123 = vld [vmem:[#allocation2 + $0x16c] sm:$0xf]
    %v124 = vld [vmem:[#allocation2 + $0x170] sm:$0xf]
    %v125 = vld [vmem:[#allocation2 + $0x174] sm:$0xf]
    %v126 = vld [vmem:[#allocation2 + $0x178] sm:$0xf]
    %v127 = vld [vmem:[#allocation2 + $0x17c] sm:$0xf]
    %v128 = vld [vmem:[#allocation2 + $0x180] sm:$0xf]
    %v129 = vld [vmem:[#allocation2 + $0x184] sm:$0xf]
    %v130 = vld [vmem:[#allocation2 + $0x188] sm:$0xf]
    %v131 = vld [vmem:[#allocation2 + $0x18c] sm:$0xf]
    %v132 = vld [vmem:[#allocation2 + $0x190] sm:$0xf]
    %v133 = vld [vmem:[#allocation2 + $0x194] sm:$0xf]
    %v134 = vld [vmem:[#allocation2 + $0x198] sm:$0xf]
    %v135 = vld [vmem:[#allocation2 + $0x19c] sm:$0xf]
    %v136 = vld [vmem:[#allocation2 + $0x1a0] sm:$0xf]
    %v137 = vld [vmem:[#allocation2 + $0x1a4] sm:$0xf]
    %v138 = vld [vmem:[#allocation2 + $0x1a8] sm:$0xf]
    %v139 = vld [vmem:[#allocation2 + $0x1ac] sm:$0xf]
    %v140 = vld [vmem:[#allocation2 + $0x1b0] sm:$0xf]
    %v141 = vld [vmem:[#allocation2 + $0x1b4] sm:$0xf]
    %v142 = vld [vmem:[#allocation2 + $0x1b8] sm:$0xf]
    %v143 = vld [vmem:[#allocation2 + $0x1bc] sm:$0xf]
    %v144 = vld [vmem:[#allocation2 + $0x1c0] sm:$0xf]
    %v145 = vld [vmem:[#allocation2 + $0x1c4] sm:$0xf]
    %v146 = vld [vmem:[#allocation2 + $0x1c8] sm:$0xf]
    %v147 = vld [vmem:[#allocation2 + $0x1cc] sm:$0xf]
    %v148 = vld [vmem:[#allocation2 + $0x1d0] sm:$0xf]
    %v149 = vld [vmem:[#allocation2 + $0x1d4] sm:$0xf]
    %v150 = vld [vmem:[#allocation2 + $0x1d8] sm:$0xf]
    %v151 = vld [vmem:[#allocation2 + $0x1dc] sm:$0xf]
    %v152 = vld [vmem:[#allocation2 + $0x1e0] sm:$0xf]
    %v153 = vld [vmem:[#allocation2 + $0x1e4] sm:$0xf]
    %v154 = vld [vmem:[#allocation2 + $0x1e8] sm:$0xf]
    %v155 = vld [vmem:[#allocation2 + $0x1ec] sm:$0xf]
    %v156 = vld [vmem:[#allocation2 + $0x1f0] sm:$0xf]
    %v157 = vld [vmem:[#allocation2 + $0x1f4] sm:$0xf]
    %v158 = vld [vmem:[#allocation2 + $0x1f8] sm:$0xf]
    %v159 = vld [vmem:[#allocation2 + $0x1fc] sm:$0xf]
    %v160 = vld [vmem:[%s2] sm:$0x1]
    %v162 = vperm.slane %v160, 0
    %165 = vst [vmem:[#allocation1] ss:$9 sm:$0xff] %v31
    %v166 = vld [vmem:[#allocation1] sm:$0xff]
    %v167 = vld [vmem:[#allocation1 + $0x9] sm:$0xff]
    %v168 = vld [vmem:[#allocation1 + $0x12] sm:$0xff]
    %v169 = vld [vmem:[#allocation1 + $0x1b] sm:$0xff]
    %v170 = vld [vmem:[#allocation1 + $0x24] sm:$0xff]
    %v171 = vld [vmem:[#allocation1 + $0x2d] sm:$0xff]
    %v172 = vld [vmem:[#allocation1 + $0x36] sm:$0xff]
    %v173 = vld [vmem:[#allocation1 + $0x3f] sm:$0xff]
    %v310 = vunpack.c.l.b16 %v32
    %v311 = vunpack.c.l.b16 %v33
    %v312 = vunpack.c.l.b16 %v34
    %v313 = vunpack.c.l.b16 %v35
    %v314 = vunpack.c.l.b16 %v36
    %v315 = vunpack.c.l.b16 %v37
    %v316 = vunpack.c.l.b16 %v38
    %v317 = vunpack.c.l.b16 %v39
    %v318 = vunpack.c.l.b16 %v40
    %v319 = vunpack.c.l.b16 %v41
    %v320 = vunpack.c.l.b16 %v42
    %v321 = vunpack.c.l.b16 %v43
    %v322 = vunpack.c.l.b16 %v44
    %v323 = vunpack.c.l.b16 %v45
    %v324 = vunpack.c.l.b16 %v46
    %v325 = vunpack.c.l.b16 %v47
    %v326 = vunpack.c.l.b16 %v48
    %v327 = vunpack.c.l.b16 %v49
    %v328 = vunpack.c.l.b16 %v50
    %v329 = vunpack.c.l.b16 %v51
    %v330 = vunpack.c.l.b16 %v52
    %v331 = vunpack.c.l.b16 %v53
    %v332 = vunpack.c.l.b16 %v54
    %v333 = vunpack.c.l.b16 %v55
    %v334 = vunpack.c.l.b16 %v56
    %v335 = vunpack.c.l.b16 %v57
    %v336 = vunpack.c.l.b16 %v58
    %v337 = vunpack.c.l.b16 %v59
    %v338 = vunpack.c.l.b16 %v60
    %v339 = vunpack.c.l.b16 %v61
    %v340 = vunpack.c.l.b16 %v62
    %v341 = vunpack.c.l.b16 %v63
    %v342 = vunpack.c.l.b16 %v64
    %v343 = vunpack.c.l.b16 %v65
    %v344 = vunpack.c.l.b16 %v66
    %v345 = vunpack.c.l.b16 %v67
    %v346 = vunpack.c.l.b16 %v68
    %v347 = vunpack.c.l.b16 %v69
    %v348 = vunpack.c.l.b16 %v70
    %v349 = vunpack.c.l.b16 %v71
    %v350 = vunpack.c.l.b16 %v72
    %v351 = vunpack.c.l.b16 %v73
    %v352 = vunpack.c.l.b16 %v74
    %v353 = vunpack.c.l.b16 %v75
    %v354 = vunpack.c.l.b16 %v76
    %v355 = vunpack.c.l.b16 %v77
    %v356 = vunpack.c.l.b16 %v78
    %v357 = vunpack.c.l.b16 %v79
    %v358 = vunpack.c.l.b16 %v80
    %v359 = vunpack.c.l.b16 %v81
    %v360 = vunpack.c.l.b16 %v82
    %v361 = vunpack.c.l.b16 %v83
    %v362 = vunpack.c.l.b16 %v84
    %v363 = vunpack.c.l.b16 %v85
    %v364 = vunpack.c.l.b16 %v86
    %v365 = vunpack.c.l.b16 %v87
    %v366 = vunpack.c.l.b16 %v88
    %v367 = vunpack.c.l.b16 %v89
    %v368 = vunpack.c.l.b16 %v90
    %v369 = vunpack.c.l.b16 %v91
    %v370 = vunpack.c.l.b16 %v92
    %v371 = vunpack.c.l.b16 %v93
    %v372 = vunpack.c.l.b16 %v94
    %v373 = vunpack.c.l.b16 %v95
    %v374 = vunpack.c.l.b16 %v96
    %v375 = vunpack.c.l.b16 %v97
    %v376 = vunpack.c.l.b16 %v98
    %v377 = vunpack.c.l.b16 %v99
    %v378 = vunpack.c.l.b16 %v100
    %v379 = vunpack.c.l.b16 %v101
    %v380 = vunpack.c.l.b16 %v102
    %v381 = vunpack.c.l.b16 %v103
    %v382 = vunpack.c.l.b16 %v104
    %v383 = vunpack.c.l.b16 %v105
    %v384 = vunpack.c.l.b16 %v106
    %v385 = vunpack.c.l.b16 %v107
    %v386 = vunpack.c.l.b16 %v108
    %v387 = vunpack.c.l.b16 %v109
    %v388 = vunpack.c.l.b16 %v110
    %v389 = vunpack.c.l.b16 %v111
    %v390 = vunpack.c.l.b16 %v112
    %v391 = vunpack.c.l.b16 %v113
    %v392 = vunpack.c.l.b16 %v114
    %v393 = vunpack.c.l.b16 %v115
    %v394 = vunpack.c.l.b16 %v116
    %v395 = vunpack.c.l.b16 %v117
    %v396 = vunpack.c.l.b16 %v118
    %v397 = vunpack.c.l.b16 %v119
    %v398 = vunpack.c.l.b16 %v120
    %v399 = vunpack.c.l.b16 %v121
    %v400 = vunpack.c.l.b16 %v122
    %v401 = vunpack.c.l.b16 %v123
    %v402 = vunpack.c.l.b16 %v124
    %v403 = vunpack.c.l.b16 %v125
    %v404 = vunpack.c.l.b16 %v126
    %v405 = vunpack.c.l.b16 %v127
    %v406 = vunpack.c.l.b16 %v128
    %v407 = vunpack.c.l.b16 %v129
    %v408 = vunpack.c.l.b16 %v130
    %v409 = vunpack.c.l.b16 %v131
    %v410 = vunpack.c.l.b16 %v132
    %v411 = vunpack.c.l.b16 %v133
    %v412 = vunpack.c.l.b16 %v134
    %v413 = vunpack.c.l.b16 %v135
    %v414 = vunpack.c.l.b16 %v136
    %v415 = vunpack.c.l.b16 %v137
    %v416 = vunpack.c.l.b16 %v138
    %v417 = vunpack.c.l.b16 %v139
    %v418 = vunpack.c.l.b16 %v140
    %v419 = vunpack.c.l.b16 %v141
    %v420 = vunpack.c.l.b16 %v142
    %v421 = vunpack.c.l.b16 %v143
    %v422 = vunpack.c.l.b16 %v144
    %v423 = vunpack.c.l.b16 %v145
    %v424 = vunpack.c.l.b16 %v146
    %v425 = vunpack.c.l.b16 %v147
    %v426 = vunpack.c.l.b16 %v148
    %v427 = vunpack.c.l.b16 %v149
    %v428 = vunpack.c.l.b16 %v150
    %v429 = vunpack.c.l.b16 %v151
    %v430 = vunpack.c.l.b16 %v152
    %v431 = vunpack.c.l.b16 %v153
    %v432 = vunpack.c.l.b16 %v154
    %v433 = vunpack.c.l.b16 %v155
    %v434 = vunpack.c.l.b16 %v156
    %v435 = vunpack.c.l.b16 %v157
    %v436 = vunpack.c.l.b16 %v158
    %v437 = vunpack.c.l.b16 %v159
    %v438 = vpack.c.b16 %v311, %v310
    %v439 = vpack.c.b16 %v313, %v312
    %v440 = vpack.c.b16 %v315, %v314
    %v441 = vpack.c.b16 %v317, %v316
    %v442 = vpack.c.b16 %v319, %v318
    %v443 = vpack.c.b16 %v321, %v320
    %v444 = vpack.c.b16 %v323, %v322
    %v445 = vpack.c.b16 %v325, %v324
    %v446 = vpack.c.b16 %v327, %v326
    %v447 = vpack.c.b16 %v329, %v328
    %v448 = vpack.c.b16 %v331, %v330
    %v449 = vpack.c.b16 %v333, %v332
    %v450 = vpack.c.b16 %v335, %v334
    %v451 = vpack.c.b16 %v337, %v336
    %v452 = vpack.c.b16 %v339, %v338
    %v453 = vpack.c.b16 %v341, %v340
    %v454 = vpack.c.b16 %v343, %v342
    %v455 = vpack.c.b16 %v345, %v344
    %v456 = vpack.c.b16 %v347, %v346
    %v457 = vpack.c.b16 %v349, %v348
    %v458 = vpack.c.b16 %v351, %v350
    %v459 = vpack.c.b16 %v353, %v352
    %v460 = vpack.c.b16 %v355, %v354
    %v461 = vpack.c.b16 %v357, %v356
    %v462 = vpack.c.b16 %v359, %v358
    %v463 = vpack.c.b16 %v361, %v360
    %v464 = vpack.c.b16 %v363, %v362
    %v465 = vpack.c.b16 %v365, %v364
    %v466 = vpack.c.b16 %v367, %v366
    %v467 = vpack.c.b16 %v369, %v368
    %v468 = vpack.c.b16 %v371, %v370
    %v469 = vpack.c.b16 %v373, %v372
    %v470 = vpack.c.b16 %v375, %v374
    %v471 = vpack.c.b16 %v377, %v376
    %v472 = vpack.c.b16 %v379, %v378
    %v473 = vpack.c.b16 %v381, %v380
    %v474 = vpack.c.b16 %v383, %v382
    %v475 = vpack.c.b16 %v385, %v384
    %v476 = vpack.c.b16 %v387, %v386
    %v477 = vpack.c.b16 %v389, %v388
    %v478 = vpack.c.b16 %v391, %v390
    %v479 = vpack.c.b16 %v393, %v392
    %v480 = vpack.c.b16 %v395, %v394
    %v481 = vpack.c.b16 %v397, %v396
    %v482 = vpack.c.b16 %v399, %v398
    %v483 = vpack.c.b16 %v401, %v400
    %v484 = vpack.c.b16 %v403, %v402
    %v485 = vpack.c.b16 %v405, %v404
    %v486 = vpack.c.b16 %v407, %v406
    %v487 = vpack.c.b16 %v409, %v408
    %v488 = vpack.c.b16 %v411, %v410
    %v489 = vpack.c.b16 %v413, %v412
    %v490 = vpack.c.b16 %v415, %v414
    %v491 = vpack.c.b16 %v417, %v416
    %v492 = vpack.c.b16 %v419, %v418
    %v493 = vpack.c.b16 %v421, %v420
    %v494 = vpack.c.b16 %v423, %v422
    %v495 = vpack.c.b16 %v425, %v424
    %v496 = vpack.c.b16 %v427, %v426
    %v497 = vpack.c.b16 %v429, %v428
    %v498 = vpack.c.b16 %v431, %v430
    %v499 = vpack.c.b16 %v433, %v432
    %v500 = vpack.c.b16 %v435, %v434
    %v501 = vpack.c.b16 %v437, %v436
    %566 = vmatpush.bf16.msra.mxu0 %v445
    %567 = vmatpush.bf16.msra.mxu0 %v444
    %568 = vmatpush.bf16.msra.mxu0 %v443
    %569 = vmatpush.bf16.msra.mxu0 %v442
    %570 = vmatpush.bf16.msra.mxu0 %v441
    %571 = vmatpush.bf16.msra.mxu0 %v440
    %572 = vmatpush.bf16.msra.mxu0 %v439
    %573 = vmatpush.bf16.msra.mxu0 %v438
    %574 = vmatmul.bf16.gmra.mxu0 %v166
    %v575 = vpop.f32.mrf.mxu0
    %v576 = vadd.f32 %v162, %v575
    %v577 = vpop.f32.mrf.mxu0
    %578 = vdwg.mxu0
    %579 = vmatpush.bf16.msra.mxu0 %v453
    %580 = vmatpush.bf16.msra.mxu0 %v452
    %581 = vmatpush.bf16.msra.mxu0 %v451
    %582 = vmatpush.bf16.msra.mxu0 %v450
    %583 = vmatpush.bf16.msra.mxu0 %v449
    %584 = vmatpush.bf16.msra.mxu0 %v448
    %585 = vmatpush.bf16.msra.mxu0 %v447
    %586 = vmatpush.bf16.msra.mxu0 %v446
    %587 = vmatmul.bf16.gmra.mxu0 %v167
    %v588 = vpop.f32.mrf.mxu0
    %v589 = vadd.f32 %v576, %v588
    %v590 = vpop.f32.mrf.mxu0
    %591 = vdwg.mxu0
    %592 = vmatpush.bf16.msra.mxu0 %v461
    %593 = vmatpush.bf16.msra.mxu0 %v460
    %594 = vmatpush.bf16.msra.mxu0 %v459
    %595 = vmatpush.bf16.msra.mxu0 %v458
    %596 = vmatpush.bf16.msra.mxu0 %v457
    %597 = vmatpush.bf16.msra.mxu0 %v456
    %598 = vmatpush.bf16.msra.mxu0 %v455
    %599 = vmatpush.bf16.msra.mxu0 %v454
    %600 = vmatmul.bf16.gmra.mxu0 %v168
    %v601 = vpop.f32.mrf.mxu0
    %v602 = vadd.f32 %v589, %v601
    %v603 = vpop.f32.mrf.mxu0
    %604 = vdwg.mxu0
    %605 = vmatpush.bf16.msra.mxu0 %v469
    %606 = vmatpush.bf16.msra.mxu0 %v468
    %607 = vmatpush.bf16.msra.mxu0 %v467
    %608 = vmatpush.bf16.msra.mxu0 %v466
    %609 = vmatpush.bf16.msra.mxu0 %v465
    %610 = vmatpush.bf16.msra.mxu0 %v464
    %611 = vmatpush.bf16.msra.mxu0 %v463
    %612 = vmatpush.bf16.msra.mxu0 %v462
    %613 = vmatmul.bf16.gmra.mxu0 %v169
    %v614 = vpop.f32.mrf.mxu0
    %v615 = vadd.f32 %v602, %v614
    %v616 = vpop.f32.mrf.mxu0
    %617 = vdwg.mxu0
    %618 = vmatpush.bf16.msra.mxu0 %v477
    %619 = vmatpush.bf16.msra.mxu0 %v476
    %620 = vmatpush.bf16.msra.mxu0 %v475
    %621 = vmatpush.bf16.msra.mxu0 %v474
    %622 = vmatpush.bf16.msra.mxu0 %v473
    %623 = vmatpush.bf16.msra.mxu0 %v472
    %624 = vmatpush.bf16.msra.mxu0 %v471
    %625 = vmatpush.bf16.msra.mxu0 %v470
    %626 = vmatmul.bf16.gmra.mxu0 %v170
    %v627 = vpop.f32.mrf.mxu0
    %v628 = vadd.f32 %v615, %v627
    %v629 = vpop.f32.mrf.mxu0
    %630 = vdwg.mxu0
    %631 = vmatpush.bf16.msra.mxu0 %v485
    %632 = vmatpush.bf16.msra.mxu0 %v484
    %633 = vmatpush.bf16.msra.mxu0 %v483
    %634 = vmatpush.bf16.msra.mxu0 %v482
    %635 = vmatpush.bf16.msra.mxu0 %v481
    %636 = vmatpush.bf16.msra.mxu0 %v480
    %637 = vmatpush.bf16.msra.mxu0 %v479
    %638 = vmatpush.bf16.msra.mxu0 %v478
    %639 = vmatmul.bf16.gmra.mxu0 %v171
    %v640 = vpop.f32.mrf.mxu0
    %v641 = vadd.f32 %v628, %v640
    %v642 = vpop.f32.mrf.mxu0
    %643 = vdwg.mxu0
    %644 = vmatpush.bf16.msra.mxu0 %v493
    %645 = vmatpush.bf16.msra.mxu0 %v492
    %646 = vmatpush.bf16.msra.mxu0 %v491
    %647 = vmatpush.bf16.msra.mxu0 %v490
    %648 = vmatpush.bf16.msra.mxu0 %v489
    %649 = vmatpush.bf16.msra.mxu0 %v488
    %650 = vmatpush.bf16.msra.mxu0 %v487
    %651 = vmatpush.bf16.msra.mxu0 %v486
    %652 = vmatmul.bf16.gmra.mxu0 %v172
    %v653 = vpop.f32.mrf.mxu0
    %v654 = vadd.f32 %v641, %v653
    %v655 = vpop.f32.mrf.mxu0
    %656 = vdwg.mxu0
    %657 = vmatpush.bf16.msra.mxu0 %v501
    %658 = vmatpush.bf16.msra.mxu0 %v500
    %659 = vmatpush.bf16.msra.mxu0 %v499
    %660 = vmatpush.bf16.msra.mxu0 %v498
    %661 = vmatpush.bf16.msra.mxu0 %v497
    %662 = vmatpush.bf16.msra.mxu0 %v496
    %663 = vmatpush.bf16.msra.mxu0 %v495
    %664 = vmatpush.bf16.msra.mxu0 %v494
    %665 = vmatmul.bf16.gmra.mxu0 %v173
    %v666 = vpop.f32.mrf.mxu0
    %v667 = vadd.f32 %v654, %v666
    %v668 = vpop.f32.mrf.mxu0
    %669 = vdwg.mxu0
    %670 = vst [vmem:[#allocation5] sm:$0x3] %v667
    // Predicated region
    $region18: #{proj_head_forward.1} parent=1 // pred_check
      _
    $region19: #{proj_head_forward.1} parent=1 // pred_check_branch
      %672 = sbr.rel (0) target = $region21
    $region20: #{proj_head_forward.1} parent=1 // pred_region
      %674 = vsyncadd [#allocation4], 0
      %s676 = sshll.u32 [#allocation5], 4
      %s677 = int_to_ptr.vmem [resolvable:$true] %s676
      %s678 = sshll.u32 %s3, 4
      %s679 = int_to_ptr.hbm [resolvable:$true] %s678
      %681 = dma.vmem_to_hbm [thread:$0]  %s677, 32, %s679, [#allocation4]
    $region21: #{proj_head_forward.1} parent=1 // pred_fallthru
      _
    // Predicated region
    $region22: #{proj_head_forward.1} parent=1 // pred_check
      _
    $region23: #{proj_head_forward.1} parent=1 // pred_check_branch
      %683 = sbr.rel (0) target = $region25
    $region24: #{proj_head_forward.1} parent=1 // pred_region
      %685 = dma.done [#allocation4], 32
    $region25: #{proj_head_forward.1} parent=1 // pred_fallthru
      _
    %686 = vsyncpa [#allocation3], 1
    %687 = vsyncpa [#allocation4], 1

</llo_original>
